<compile_context>
chip_gen: v6e
topology: v6e:2x2x1
jax: 0.10.0
libtpu: 0.0.40
codegen_flags: <defaults>
</compile_context>

<pallas_src>
import math

import jax
import jax.numpy as jnp
from jax.experimental import pallas as pl
from jax.experimental.pallas import tpu as pltpu

LOG2 = math.log(2.0)
_TILE_BYTES = 2 * 1024 * 1024  # ~2 MiB/tile -> 12 MiB double-buffered (fits v5e default)


def _tanh_flow_kernel(x_ref, y_ref, logdet_ref):
    x = x_ref[...].astype(jnp.float32)

    # Stable softplus(-2x) = max(-2x, 0) + log1p(exp(-2|x|))
    z = -2.0 * x
    sp = jnp.maximum(z, 0.0) + jnp.log1p(jnp.exp(-jnp.abs(z)))

    y_ref[...] = jnp.tanh(x).astype(y_ref.dtype)                      # EUP, exact
    logdet_ref[...] = (-2.0 * (x - LOG2 + sp)).astype(logdet_ref.dtype)


def _sublane_multiple(itemsize):
    return {4: 8, 2: 16, 1: 32}.get(itemsize, 8)


def _choose_layout(n):
    """Pick (lane, rows, pad) for a lane-dense 2-D view of the flat tensor."""
    # Prefer a zero-copy factorization (no pad, no output slice).
    for lane in (1024, 512, 256, 2048, 128):
        if n % lane == 0 and n // lane >= 8:
            return lane, n // lane, 0
    for lane in (128, 256, 512, 1024, 2048):
        if n % lane == 0:
            return lane, n // lane, 0
    # Rare fallback: pad by < 128 elements.
    lane = 128
    rows = -(-n // lane)
    return lane, rows, rows * lane - n


def _choose_tm(rows, lane, itemsize):
    sub = _sublane_multiple(itemsize)
    if rows <= sub:
        return rows  # block == full array dim (allowed by the (8,128) rule)
    tm = min(rows, max(sub, _TILE_BYTES // (lane * itemsize)))
    tm = max(sub, (tm // sub) * sub)
    # v7x megacore: try to give the parallel grid axis >= 4 steps.
    while tm > sub and -(-rows // tm) < 4:
        tm = max(sub, ((tm // 2) // sub) * sub)
    return tm


def tanh_flow(x):
    """Elementwise tanh flow. Returns (tanh(x), logdet), same shape/dtype as x."""
    orig_shape = x.shape
    dtype = x.dtype
    itemsize = jnp.dtype(dtype).itemsize
    n = x.size

    lane, rows, pad = _choose_layout(n)
    flat = x.reshape(-1)
    if pad:
        flat = jnp.pad(flat, (0, pad))  # zeros are safe (logdet(0) = 0)
    x2d = flat.reshape(rows, lane)

    tm = _choose_tm(rows, lane, itemsize)
    grid = (pl.cdiv(rows, tm),)  # ragged last block handled by Pallas
    block = (tm, lane)

    cost = pl.CostEstimate(
        flops=10 * n,
        transcendentals=3 * n,
        bytes_accessed=3 * n * itemsize,
    )

    y2d, ld2d = pl.pallas_call(
        _tanh_flow_kernel,
        out_shape=(
            jax.ShapeDtypeStruct((rows, lane), dtype),
            jax.ShapeDtypeStruct((rows, lane), dtype),
        ),
        grid=grid,
        in_specs=[pl.BlockSpec(block, lambda i: (i, 0))],
        out_specs=(
            pl.BlockSpec(block, lambda i: (i, 0)),
            pl.BlockSpec(block, lambda i: (i, 0)),
        ),
        compiler_params=pltpu.CompilerParams(
            dimension_semantics=("parallel",),
        ),
        cost_estimate=cost,
    )(x2d)

    if pad:
        y = y2d.reshape(-1)[:n].reshape(orig_shape)
        logdet = ld2d.reshape(-1)[:n].reshape(orig_shape)
    else:
        y = y2d.reshape(orig_shape)
        logdet = ld2d.reshape(orig_shape)
    return y, logdet


if __name__ == "__main__":
    key = jax.random.PRNGKey(0)
    # NCHW, small shapes consistent with the module
    x = jax.random.normal(key, (2, 4, 16, 16), dtype=jnp.float32)

    y, logdet = tanh_flow(x)
    jax.block_until_ready((y, logdet))

    # reference check in plain JAX
    y_ref = jnp.tanh(x)
    logdet_ref = -2.0 * (x - LOG2 + jax.nn.softplus(-2.0 * x))

    assert jnp.allclose(y, y_ref, atol=1e-6), "tanh mismatch"
    assert jnp.allclose(logdet, logdet_ref, atol=1e-5), "logdet mismatch"

    print("KERNEL_OK")
</pallas_src>

<mosaic_0001>
module attributes {stable_mosaic.version = 11 : i64} {
  func.func @_tanh_flow_kernel(%arg0: i32, %arg1: memref<8x256xf32, #tpu.memory_space<vmem>>, %arg2: memref<8x256xf32, #tpu.memory_space<vmem>>, %arg3: memref<8x256xf32, #tpu.memory_space<vmem>>) attributes {dimension_semantics = [#tpu.dimension_semantics<parallel>], iteration_bounds = array<i64: 1>, scalar_prefetch = 0 : i64, scratch_operands = 0 : i64, tpu.core_type = #tpu.core_type<tc>, window_params = [{transform_indices = @transform_0, window_bounds = array<i64: 8, 256>}, {transform_indices = @transform_1, window_bounds = array<i64: 8, 256>}, {transform_indices = @transform_2, window_bounds = array<i64: 8, 256>}]} {
    %c0 = arith.constant 0 : index
    %c0_0 = arith.constant 0 : index
    %0 = vector.load %arg1[%c0, %c0_0] : memref<8x256xf32, #tpu.memory_space<vmem>>, vector<8x256xf32>
    %cst = arith.constant -2.000000e+00 : f32
    %1 = vector.broadcast %cst : f32 to vector<8x256xf32>
    %2 = arith.mulf %1, %0 : vector<8x256xf32>
    %cst_1 = arith.constant 0.000000e+00 : f32
    %3 = vector.broadcast %cst_1 : f32 to vector<8x256xf32>
    %4 = arith.maximumf %2, %3 : vector<8x256xf32>
    %5 = math.absf %2 : vector<8x256xf32>
    %cst_2 = arith.constant 0.000000e+00 : f32
    %6 = vector.broadcast %cst_2 : f32 to vector<8x256xf32>
    %7 = arith.subf %6, %5 : vector<8x256xf32>
    %8 = math.exp %7 : vector<8x256xf32>
    %9 = math.log1p %8 : vector<8x256xf32>
    %10 = arith.addf %4, %9 : vector<8x256xf32>
    %11 = math.tanh %0 : vector<8x256xf32>
    %c0_3 = arith.constant 0 : index
    %c0_4 = arith.constant 0 : index
    %12 = vector.load %arg2[%c0_3, %c0_4] : memref<8x256xf32, #tpu.memory_space<vmem>>, vector<8x256xf32>
    tpu.vector_store %arg2[%c0_3, %c0_4], %11 {strides = array<i32>} : memref<8x256xf32, #tpu.memory_space<vmem>>, vector<8x256xf32>,
    %cst_5 = arith.constant 0.693147182 : f32
    %13 = vector.broadcast %cst_5 : f32 to vector<8x256xf32>
    %14 = arith.subf %0, %13 : vector<8x256xf32>
    %15 = arith.addf %14, %10 : vector<8x256xf32>
    %cst_6 = arith.constant -2.000000e+00 : f32
    %16 = vector.broadcast %cst_6 : f32 to vector<8x256xf32>
    %17 = arith.mulf %16, %15 : vector<8x256xf32>
    %c0_7 = arith.constant 0 : index
    %c0_8 = arith.constant 0 : index
    %18 = vector.load %arg3[%c0_7, %c0_8] : memref<8x256xf32, #tpu.memory_space<vmem>>, vector<8x256xf32>
    tpu.vector_store %arg3[%c0_7, %c0_8], %17 {strides = array<i32>} : memref<8x256xf32, #tpu.memory_space<vmem>>, vector<8x256xf32>,
    return
  }
  func.func @transform_0(%arg0: i32) -> (i32, i32) {
    %c0_i32 = arith.constant 0 : i32
    %c0_i32_0 = arith.constant 0 : i32
    return %arg0, %c0_i32 : i32, i32
  }
  func.func @transform_1(%arg0: i32) -> (i32, i32) {
    %c0_i32 = arith.constant 0 : i32
    %c0_i32_0 = arith.constant 0 : i32
    return %arg0, %c0_i32 : i32, i32
  }
  func.func @transform_2(%arg0: i32) -> (i32, i32) {
    %c0_i32 = arith.constant 0 : i32
    %c0_i32_0 = arith.constant 0 : i32
    return %arg0, %c0_i32 : i32, i32
  }
}

</mosaic_0001>

<llo_original>
// kernel: tpu_custom_call.1
$region0: #{tpu_custom_call.1}
  #allocation0 [shape = 'u32[]', space=smem, size = 0x4, offset = 0x4, fixed_abs, tag = 'smem constant byte address 0x4 - core index']
  #allocation1 [shape = 'u32[144,128]{1,0:T(1,128)}', space=vmem, size = 0x12000, scoped, tag = 'internal scratch']
  %s0 = inlined_call_operand.hbm [shape: f32[8,256], index: 0, kind: input, shape index: {}]
  %s1 = inlined_call_operand.hbm [shape: f32[8,256], index: 1, kind: output, shape index: {0}]
  %s2 = inlined_call_operand.hbm [shape: f32[8,256], index: 2, kind: output, shape index: {1}]
  %3 = xla_tuple %s1, %s2
  %s4 = sld [smem:[#allocation0]]
  $region26: #{tpu_custom_call.1} parent=0
    _
  %s6 = ssub.s32 1, %s4
  %s7 = scalar_select 0, %s6, %s4
  $region1: #{tpu_custom_call.1} parent=0
    #allocation2 [shape = 'u8[8192]{0}', space=vmem, size = 0x2000, scoped, tag = 'input window, operand 0, single buffered']
    #allocation3 [shape = 's32[1]{0}', space=sflag, size = 0x4, scoped, tag = 'scoped memory for tpu_custom_call.1']
    #allocation4 [shape = 's32[1]{0}', space=sflag, size = 0x4, scoped, tag = 'scoped memory for tpu_custom_call.1']
    #allocation5 [shape = 'u8[8192]{0}', space=vmem, size = 0x2000, scoped, tag = 'output window, operand 0, single buffered']
    #allocation6 [shape = 'u8[8192]{0}', space=vmem, size = 0x2000, scoped, tag = 'output window, operand 1, single buffered']
    #allocation7 [shape = 's32[1]{0}', space=sflag, size = 0x4, scoped, tag = 'scoped memory for tpu_custom_call.1']
    %8 = vsyncpa [#allocation3], 0
    %9 = vsyncpa [#allocation4], 0
    %10 = vsyncpa [#allocation7], 0
    // Predicated region
    $region2: #{tpu_custom_call.1} parent=1 // pred_check
      _
    $region3: #{tpu_custom_call.1} parent=1 // pred_check_branch
      %12 = sbr.rel (0) target = $region5
    $region4: #{tpu_custom_call.1} parent=1 // pred_region
      %s14 = ssub.s32 256, 256
      %15 = vsyncadd [#allocation3], %s14
      %s17 = sshll.u32 [#allocation2], 4
      %s18 = int_to_ptr.vmem [resolvable:$true] %s17
      %20 = dma.hbm_to_vmem [thread:$0]  %s0, 256, %s18, [#allocation3]
    $region5: #{tpu_custom_call.1} parent=1 // pred_fallthru
      _
    // Predicated region
    $region6: #{tpu_custom_call.1} parent=1 // pred_check
      _
    $region7: #{tpu_custom_call.1} parent=1 // pred_check_branch
      %22 = sbr.rel (0) target = $region9
    $region8: #{tpu_custom_call.1} parent=1 // pred_region
      %23 = dma.done [#allocation3], 256
    $region9: #{tpu_custom_call.1} parent=1 // pred_fallthru
      _
    %v24 = vld [vmem:[#allocation2] sm:$0xff]
    %v25 = vld [vmem:[#allocation2 + $0x8] sm:$0xff]
    %v26 = vmul.f32 %v24, -2.0
    %v27 = vmul.f32 %v25, -2.0
    %v28 = vmax.f32 %v26, 0.0
    %v29 = vmax.f32 %v27, 0.0
    %v30 = vand.u32 2147483647, %v26
    %v31 = vand.u32 2147483647, %v27
    %v32 = vsub.f32 0.0, %v30
    %v33 = vsub.f32 0.0, %v31
    %v34 = vmul.f32 %v32, 1.442695
    %v35 = vpow.pop %v34
    %v36 = vmul.f32 %v33, 1.442695
    %v37 = vpow.pop %v36
    %v38 = vadd.f32 %v35, 1.0
    %v39 = vlog2.pop %v38
    %v40 = vmul.f32 %v39, 0.6931472
    %v41 = vmul.f32 -0.5, %v35
    %v42 = vadd.f32 %v41, 1.0
    %v43 = vmul.f32 %v42, %v35
    %v44 = vand.u32 2147483647, %v35
    %vm45 = vcmp.lt.f32.partialorder %v44, 0.0004427343
    %v46 = vsel %vm45, %v43, %v40
    %v47 = vadd.f32 %v37, 1.0
    %v48 = vlog2.pop %v47
    %v49 = vmul.f32 %v48, 0.6931472
    %v50 = vmul.f32 -0.5, %v37
    %v51 = vadd.f32 %v50, 1.0
    %v52 = vmul.f32 %v51, %v37
    %v53 = vand.u32 2147483647, %v37
    %vm54 = vcmp.lt.f32.partialorder %v53, 0.0004427343
    %v55 = vsel %vm54, %v52, %v49
    %v56 = vadd.f32 %v28, %v46
    %v57 = vadd.f32 %v29, %v55
    %v58 = vtanh.pop %v24
    %v59 = vtanh.pop %v25
    %60 = vst [vmem:[#allocation5] sm:$0xff] %v58
    %61 = vst [vmem:[#allocation5 + $0x8] sm:$0xff] %v59
    %v62 = vsub.f32 %v24, 0.6931472
    %v63 = vsub.f32 %v25, 0.6931472
    %v64 = vadd.f32 %v62, %v56
    %v65 = vadd.f32 %v63, %v57
    %v66 = vmul.f32 %v64, -2.0
    %v67 = vmul.f32 %v65, -2.0
    %68 = vst [vmem:[#allocation6] sm:$0xff] %v66
    %69 = vst [vmem:[#allocation6 + $0x8] sm:$0xff] %v67
    // Predicated region
    $region10: #{tpu_custom_call.1} parent=1 // pred_check
      _
    $region11: #{tpu_custom_call.1} parent=1 // pred_check_branch
      %71 = sbr.rel (0) target = $region13
    $region12: #{tpu_custom_call.1} parent=1 // pred_region
      %s73 = ssub.s32 256, 256
      %74 = vsyncadd [#allocation4], %s73
      %s76 = sshll.u32 [#allocation5], 4
      %s77 = int_to_ptr.vmem [resolvable:$true] %s76
      %79 = dma.vmem_to_hbm [thread:$0]  %s77, 256, %s1, [#allocation4]
    $region13: #{tpu_custom_call.1} parent=1 // pred_fallthru
      _
    // Predicated region
    $region14: #{tpu_custom_call.1} parent=1 // pred_check
      _
    $region15: #{tpu_custom_call.1} parent=1 // pred_check_branch
      %81 = sbr.rel (0) target = $region17
    $region16: #{tpu_custom_call.1} parent=1 // pred_region
      %s83 = ssub.s32 256, 256
      %84 = vsyncadd [#allocation7], %s83
      %s86 = sshll.u32 [#allocation6], 4
      %s87 = int_to_ptr.vmem [resolvable:$true] %s86
      %89 = dma.vmem_to_hbm [thread:$0]  %s87, 256, %s2, [#allocation7]
    $region17: #{tpu_custom_call.1} parent=1 // pred_fallthru
      _
    // Predicated region
    $region18: #{tpu_custom_call.1} parent=1 // pred_check
      _
    $region19: #{tpu_custom_call.1} parent=1 // pred_check_branch
      %91 = sbr.rel (0) target = $region21
    $region20: #{tpu_custom_call.1} parent=1 // pred_region
      %92 = dma.done [#allocation4], 256
    $region21: #{tpu_custom_call.1} parent=1 // pred_fallthru
      _
    // Predicated region
    $region22: #{tpu_custom_call.1} parent=1 // pred_check
      _
    $region23: #{tpu_custom_call.1} parent=1 // pred_check_branch
      %94 = sbr.rel (0) target = $region25
    $region24: #{tpu_custom_call.1} parent=1 // pred_region
      %95 = dma.done [#allocation7], 256
    $region25: #{tpu_custom_call.1} parent=1 // pred_fallthru
      _
    %96 = vsyncpa [#allocation3], 1
    %97 = vsyncpa [#allocation4], 1
    %98 = vsyncpa [#allocation7], 1

</llo_original>
